<compile_context>
chip_gen: v6e
topology: v6e:2x2x1
jax: 0.10.0
libtpu: 0.0.40
codegen_flags: <defaults>
</compile_context>

<pallas_src>
import jax
import jax.numpy as jnp
from jax.experimental import pallas as pl
from jax.experimental.pallas import tpu as pltpu


def _round_up(x: int, m: int) -> int:
    return ((x + m - 1) // m) * m


# ----------------------------- Pallas kernel ---------------------------------

def pooler_kernel(hs_ref, w_ref, b_ref, out_ref):
    # hs_ref: (tm, H)  f32 or bf16
    # w_ref:  (H, H)   bf16 (pre-cast in the wrapper, grid-invariant)
    # b_ref:  (1, H)   f32
    x = hs_ref[...]
    if x.dtype != jnp.bfloat16:
        x = x.astype(jnp.bfloat16)                    # bf16 MXU inputs
    y = jnp.dot(x, w_ref[...], preferred_element_type=jnp.float32)  # f32 acc
    y = y + b_ref[...].astype(jnp.float32)            # f32 bias add
    out_ref[...] = jnp.tanh(y).astype(out_ref.dtype)  # f32 tanh, cast on store


# ------------------------------ call builder ----------------------------------

def _build_pooler_call(M, H, tm, grid_m, out_dtype, single_buffer_invariants):
    if single_buffer_invariants:
        # Grid-invariant operands: single-buffer them (saves a full (H,H) VMEM
        # copy that default double-buffering would allocate).
        w_spec = pl.BlockSpec((H, H), lambda i: (0, 0),
                              pipeline_mode=pl.Buffered(1))
        b_spec = pl.BlockSpec((1, H), lambda i: (0, 0),
                              pipeline_mode=pl.Buffered(1))
    else:
        w_spec = pl.BlockSpec((H, H), lambda i: (0, 0))
        b_spec = pl.BlockSpec((1, H), lambda i: (0, 0))

    return pl.pallas_call(
        pooler_kernel,
        out_shape=jax.ShapeDtypeStruct((M, H), out_dtype),
        grid_spec=pltpu.PrefetchScalarGridSpec(
            num_scalar_prefetch=0,
            grid=(grid_m,),
            in_specs=[
                pl.BlockSpec((tm, H), lambda i: (i, 0)),
                w_spec,
                b_spec,
            ],
            out_specs=pl.BlockSpec((tm, H), lambda i: (i, 0)),
        ),
        compiler_params=pltpu.CompilerParams(
            dimension_semantics=("parallel",),   # megacore splits the M grid
        ),
    )


# ------------------------------ JAX wrapper -----------------------------------

def pooler_all(hidden_states, w_pool, b_pool, *, tm=512, out_dtype=None):
    """PoolerAll: tanh(Linear(hidden_states)) applied to every token.

    hidden_states: (B, L, H)   f32 or bf16 (bf16 halves input HBM traffic)
    w_pool:        (H, H)      stored transposed -> computes x @ w_pool + b_pool
    b_pool:        (H,) or (1, H)
    out_dtype:     defaults to hidden_states.dtype; pass jnp.bfloat16 to halve
                   output HBM traffic (tanh output is in [-1, 1], bf16-safe).
    """
    B, L, H = hidden_states.shape
    M = B * L
    if out_dtype is None:
        out_dtype = hidden_states.dtype

    # Tile clamping:
    #  * multiple of 16 (sublane rule for both f32 and bf16 blocks),
    #  * never larger than the (rounded-up) problem,
    #  * keep >= ~8 grid steps when the problem is big enough so each v7x
    #    TensorCore gets several iterations to software-pipeline.
    tm = max(16, min(tm, _round_up(M, 16)))
    min_steps = 8
    if M >= min_steps * 128:
        tm = min(tm, _round_up(pl.cdiv(M, min_steps), 16))
    grid_m = pl.cdiv(M, tm)   # partial trailing block handled by Pallas masking

    hs2d = hidden_states.reshape(M, H)                 # free (metadata reshape)
    w_bf16 = w_pool if w_pool.dtype == jnp.bfloat16 else w_pool.astype(jnp.bfloat16)
    b2d = b_pool.reshape(1, H).astype(jnp.float32)

    last_err = None
    for single_buf in (True, False):
        try:
            call = _build_pooler_call(M, H, tm, grid_m, out_dtype, single_buf)
            out = call(hs2d, w_bf16, b2d)
            break
        except Exception as e:  # fallback if Buffered(1) is unsupported
            last_err = e
    else:
        raise last_err

    return out.reshape(B, L, H)


def pooler_all_reference(hidden_states, w_pool, b_pool):
    """Pure-JAX reference (f32 end to end)."""
    hs = hidden_states.astype(jnp.float32)
    w = w_pool.astype(jnp.float32)
    b = b_pool.reshape(1, -1).astype(jnp.float32)
    return jnp.tanh(hs @ w + b)


# ---------------------------------- main --------------------------------------

if __name__ == "__main__":
    key = jax.random.PRNGKey(0)
    k_hs, k_w, k_b, k_hs2 = jax.random.split(key, 4)

    # Small shapes consistent with the module: batch=2, seq=8, hidden=32.
    B, L, H = 2, 8, 32
    hidden_states = jax.random.normal(k_hs, (B, L, H), jnp.float32)
    # Weight stored pre-transposed (in_features, out_features).
    w_pool = jax.random.normal(k_w, (H, H), jnp.float32) * 0.05
    b_pool = jax.random.normal(k_b, (1, H), jnp.float32) * 0.01

    # 1) f32 in / f32 out (default semantics).
    pooled = pooler_all(hidden_states, w_pool, b_pool)
    jax.block_until_ready(pooled)
    assert pooled.shape == (B, L, H)
    ref = pooler_all_reference(hidden_states, w_pool, b_pool)
    assert jnp.allclose(pooled, ref, atol=2e-2, rtol=2e-2), "pooler mismatch vs reference"

    # 2) Tail handling: B*L not a multiple of the tile (partial trailing block,
    #    no wrapper padding copy).
    B2, L2 = 3, 7
    hidden_states2 = jax.random.normal(k_hs2, (B2, L2, H), jnp.float32)
    pooled2 = pooler_all(hidden_states2, w_pool, b_pool)
    jax.block_until_ready(pooled2)
    assert pooled2.shape == (B2, L2, H)
    ref2 = pooler_all_reference(hidden_states2, w_pool, b_pool)
    assert jnp.allclose(pooled2, ref2, atol=2e-2, rtol=2e-2), "tail-block mismatch vs reference"

    # 3) Reduced-HBM path: bf16 activations in, bf16 out.
    hs_bf16 = hidden_states.astype(jnp.bfloat16)
    pooled3 = pooler_all(hs_bf16, w_pool, b_pool, out_dtype=jnp.bfloat16)
    jax.block_until_ready(pooled3)
    assert pooled3.shape == (B, L, H) and pooled3.dtype == jnp.bfloat16
    ref3 = pooler_all_reference(hs_bf16, w_pool, b_pool)
    assert jnp.allclose(pooled3.astype(jnp.float32), ref3, atol=2e-2, rtol=2e-2), \
        "bf16 path mismatch vs reference"

    print("KERNEL_OK")
</pallas_src>

<mosaic_0001>
module attributes {stable_mosaic.version = 11 : i64} {
  func.func @pooler_kernel(%arg0: i32, %arg1: memref<16x32xf32, #tpu.memory_space<vmem>>, %arg2: memref<32x32xbf16, #tpu.memory_space<vmem>>, %arg3: memref<1x32xf32, #tpu.memory_space<vmem>>, %arg4: memref<16x32xf32, #tpu.memory_space<vmem>>) attributes {dimension_semantics = [#tpu.dimension_semantics<parallel>], iteration_bounds = array<i64: 1>, scalar_prefetch = 0 : i64, scratch_operands = 0 : i64, tpu.core_type = #tpu.core_type<tc>, window_params = [{transform_indices = @transform_0, window_bounds = array<i64: 16, 32>}, {pipeline_mode = #tpu.pipeline_mode<synchronous>, transform_indices = @transform_1, window_bounds = array<i64: 32, 32>}, {pipeline_mode = #tpu.pipeline_mode<synchronous>, transform_indices = @transform_2, window_bounds = array<i64: 1, 32>}, {transform_indices = @transform_3, window_bounds = array<i64: 16, 32>}]} {
    %c0 = arith.constant 0 : index
    %c0_0 = arith.constant 0 : index
    %0 = vector.load %arg1[%c0, %c0_0] : memref<16x32xf32, #tpu.memory_space<vmem>>, vector<16x32xf32>
    %1 = arith.truncf %0 : vector<16x32xf32> to vector<16x32xbf16>
    %c0_1 = arith.constant 0 : index
    %c0_2 = arith.constant 0 : index
    %2 = vector.load %arg2[%c0_1, %c0_2] : memref<32x32xbf16, #tpu.memory_space<vmem>>, vector<32x32xbf16>
    %cst = arith.constant dense<0.000000e+00> : vector<16x32xf32>
    %3 = tpu.matmul %1, %2, %cst {dimension_numbers = #tpu.dot_dimension_numbers<[1], [0], [0], [1], [0, 0, 1, 1], [], []>} : vector<16x32xbf16>, vector<32x32xbf16>, vector<16x32xf32> -> vector<16x32xf32>
    %c0_3 = arith.constant 0 : index
    %c0_4 = arith.constant 0 : index
    %4 = vector.load %arg3[%c0_3, %c0_4] : memref<1x32xf32, #tpu.memory_space<vmem>>, vector<1x32xf32>
    %5 = vector.broadcast %4 : vector<1x32xf32> to vector<16x32xf32>
    %6 = arith.addf %3, %5 : vector<16x32xf32>
    %7 = math.tanh %6 : vector<16x32xf32>
    %c0_5 = arith.constant 0 : index
    %c0_6 = arith.constant 0 : index
    %8 = vector.load %arg4[%c0_5, %c0_6] : memref<16x32xf32, #tpu.memory_space<vmem>>, vector<16x32xf32>
    tpu.vector_store %arg4[%c0_5, %c0_6], %7 {strides = array<i32>} : memref<16x32xf32, #tpu.memory_space<vmem>>, vector<16x32xf32>,
    return
  }
  func.func @transform_0(%arg0: i32) -> (i32, i32) {
    %c0_i32 = arith.constant 0 : i32
    %c0_i32_0 = arith.constant 0 : i32
    return %arg0, %c0_i32 : i32, i32
  }
  func.func @transform_1(%arg0: i32) -> (i32, i32) {
    %c0_i32 = arith.constant 0 : i32
    %c0_i32_0 = arith.constant 0 : i32
    %c0_i32_1 = arith.constant 0 : i32
    return %c0_i32, %c0_i32_0 : i32, i32
  }
  func.func @transform_2(%arg0: i32) -> (i32, i32) {
    %c0_i32 = arith.constant 0 : i32
    %c0_i32_0 = arith.constant 0 : i32
    %c0_i32_1 = arith.constant 0 : i32
    return %c0_i32, %c0_i32_0 : i32, i32
  }
  func.func @transform_3(%arg0: i32) -> (i32, i32) {
    %c0_i32 = arith.constant 0 : i32
    %c0_i32_0 = arith.constant 0 : i32
    return %arg0, %c0_i32 : i32, i32
  }
}

module attributes {stable_mosaic.version = 11 : i64} {
  func.func @pooler_kernel(%arg0: i32, %arg1: memref<16x32xf32, #tpu.memory_space<vmem>>, %arg2: memref<32x32xbf16, #tpu.memory_space<vmem>>, %arg3: memref<1x32xf32, #tpu.memory_space<vmem>>, %arg4: memref<16x32xf32, #tpu.memory_space<vmem>>) attributes {dimension_semantics = [#tpu.dimension_semantics<parallel>], iteration_bounds = array<i64: 1>, scalar_prefetch = 0 : i64, scratch_operands = 0 : i64, tpu.core_type = #tpu.core_type<tc>, window_params = [{transform_indices = @transform_0, window_bounds = array<i64: 16, 32>}, {pipeline_mode = #tpu.pipeline_mode<synchronous>, transform_indices = @transform_1, window_bounds = array<i64: 32, 32>}, {pipeline_mode = #tpu.pipeline_mode<synchronous>, transform_indices = @transform_2, window_bounds = array<i64: 1, 32>}, {transform_indices = @transform_3, window_bounds = array<i64: 16, 32>}]} {
    %c0 = arith.constant 0 : index
    %c0_0 = arith.constant 0 : index
    %0 = vector.load %arg1[%c0, %c0_0] : memref<16x32xf32, #tpu.memory_space<vmem>>, vector<16x32xf32>
    %1 = arith.truncf %0 : vector<16x32xf32> to vector<16x32xbf16>
    %c0_1 = arith.constant 0 : index
    %c0_2 = arith.constant 0 : index
    %2 = vector.load %arg2[%c0_1, %c0_2] : memref<32x32xbf16, #tpu.memory_space<vmem>>, vector<32x32xbf16>
    %cst = arith.constant dense<0.000000e+00> : vector<16x32xf32>
    %3 = tpu.matmul %1, %2, %cst {dimension_numbers = #tpu.dot_dimension_numbers<[1], [0], [0], [1], [0, 0, 1, 1], [], []>} : vector<16x32xbf16>, vector<32x32xbf16>, vector<16x32xf32> -> vector<16x32xf32>
    %c0_3 = arith.constant 0 : index
    %c0_4 = arith.constant 0 : index
    %4 = vector.load %arg3[%c0_3, %c0_4] : memref<1x32xf32, #tpu.memory_space<vmem>>, vector<1x32xf32>
    %5 = vector.broadcast %4 : vector<1x32xf32> to vector<16x32xf32>
    %6 = arith.addf %3, %5 : vector<16x32xf32>
    %7 = math.tanh %6 : vector<16x32xf32>
    %c0_5 = arith.constant 0 : index
    %c0_6 = arith.constant 0 : index
    %8 = vector.load %arg4[%c0_5, %c0_6] : memref<16x32xf32, #tpu.memory_space<vmem>>, vector<16x32xf32>
    tpu.vector_store %arg4[%c0_5, %c0_6], %7 {strides = array<i32>} : memref<16x32xf32, #tpu.memory_space<vmem>>, vector<16x32xf32>,
    return
  }
  func.func @transform_0(%arg0: i32) -> (i32, i32) {
    %c0_i32 = arith.constant 0 : i32
    %c0_i32_0 = arith.constant 0 : i32
    return %arg0, %c0_i32 : i32, i32
  }
  func.func @transform_1(%arg0: i32) -> (i32, i32) {
    %c0_i32 = arith.constant 0 : i32
    %c0_i32_0 = arith.constant 0 : i32
    %c0_i32_1 = arith.constant 0 : i32
    return %c0_i32, %c0_i32_0 : i32, i32
  }
  func.func @transform_2(%arg0: i32) -> (i32, i32) {
    %c0_i32 = arith.constant 0 : i32
    %c0_i32_0 = arith.constant 0 : i32
    %c0_i32_1 = arith.constant 0 : i32
    return %c0_i32, %c0_i32_0 : i32, i32
  }
  func.func @transform_3(%arg0: i32) -> (i32, i32) {
    %c0_i32 = arith.constant 0 : i32
    %c0_i32_0 = arith.constant 0 : i32
    return %arg0, %c0_i32 : i32, i32
  }
}

</mosaic_0001>

<llo_original>
// kernel: tpu_custom_call.1
$region0: #{tpu_custom_call.1}
  #allocation0 [shape = 'u32[]', space=smem, size = 0x4, offset = 0x4, fixed_abs, tag = 'smem constant byte address 0x4 - core index']
  #allocation1 [shape = 'u32[144,128]{1,0:T(1,128)}', space=vmem, size = 0x12000, scoped, tag = 'internal scratch']
  %s0 = inlined_call_operand.hbm [shape: f32[16,32], index: 0, kind: input, shape index: {}]
  %s1 = inlined_call_operand.hbm [shape: bf16[32,32], index: 1, kind: input, shape index: {}]
  %s2 = inlined_call_operand.vmem [shape: f32[1,32], index: 2, kind: input, shape index: {}]
  %s3 = inlined_call_operand.hbm [shape: f32[16,32], index: 3, kind: output, shape index: {}]
  %s4 = sld [smem:[#allocation0]]
  $region30: #{tpu_custom_call.1} parent=0
    _
  %s6 = ssub.s32 1, %s4
  %s7 = scalar_select 0, %s6, %s4
  $region1: #{tpu_custom_call.1} parent=0
    #allocation2 [shape = 'u8[8192]{0}', space=vmem, size = 0x2000, scoped, tag = 'input window, operand 0, single buffered']
    #allocation3 [shape = 's32[1]{0}', space=sflag, size = 0x4, scoped, tag = 'scoped memory for tpu_custom_call.1']
    #allocation4 [shape = 's32[1]{0}', space=sflag, size = 0x4, scoped, tag = 'scoped memory for tpu_custom_call.1']
    #allocation5 [shape = 'u8[8192]{0}', space=vmem, size = 0x2000, scoped, tag = 'input window, operand 1, single buffered']
    #allocation6 [shape = 's32[1]{0}', space=sflag, size = 0x4, scoped, tag = 'scoped memory for tpu_custom_call.1']
    #allocation7 [shape = 'u8[8192]{0}', space=vmem, size = 0x2000, scoped, tag = 'output window, operand 0, single buffered']
    %8 = vsyncpa [#allocation3], 0
    %9 = vsyncpa [#allocation6], 0
    %10 = vsyncpa [#allocation4], 0
    // Predicated region
    $region2: #{tpu_custom_call.1} parent=1 // pred_check
      _
    $region3: #{tpu_custom_call.1} parent=1 // pred_check_branch
      %12 = sbr.rel (0) target = $region5
    $region4: #{tpu_custom_call.1} parent=1 // pred_region
      %s14 = ssub.s32 256, 256
      %15 = vsyncadd [#allocation3], %s14
      %s16 = sshll.u32 [#allocation2], 4
      %s17 = int_to_ptr.vmem [resolvable:$true] %s16
      %22 = dma.hbm_to_vmem [thread:$0]  %s0, 256, %s17, [#allocation3], 128, 128, 8
    $region5: #{tpu_custom_call.1} parent=1 // pred_fallthru
      _
    // Predicated region
    $region6: #{tpu_custom_call.1} parent=1 // pred_check
      _
    $region7: #{tpu_custom_call.1} parent=1 // pred_check_branch
      %24 = sbr.rel (0) target = $region9
    $region8: #{tpu_custom_call.1} parent=1 // pred_region
      %s26 = ssub.s32 256, 256
      %27 = vsyncadd [#allocation6], %s26
      %s28 = sshll.u32 [#allocation5], 4
      %s29 = int_to_ptr.vmem [resolvable:$true] %s28
      %34 = dma.hbm_to_vmem [thread:$0]  %s1, 256, %s29, [#allocation6], 64, 64, 4
    $region9: #{tpu_custom_call.1} parent=1 // pred_fallthru
      _
    // Predicated region
    $region10: #{tpu_custom_call.1} parent=1 // pred_check
      _
    $region11: #{tpu_custom_call.1} parent=1 // pred_check_branch
      %36 = sbr.rel (0) target = $region13
    $region12: #{tpu_custom_call.1} parent=1 // pred_region
      _
    $region13: #{tpu_custom_call.1} parent=1 // pred_fallthru
      _
    // Predicated region
    $region14: #{tpu_custom_call.1} parent=1 // pred_check
      _
    $region15: #{tpu_custom_call.1} parent=1 // pred_check_branch
      %38 = sbr.rel (0) target = $region17
    $region16: #{tpu_custom_call.1} parent=1 // pred_region
      %39 = dma.done [#allocation3], 256
    $region17: #{tpu_custom_call.1} parent=1 // pred_fallthru
      _
    // Predicated region
    $region18: #{tpu_custom_call.1} parent=1 // pred_check
      _
    $region19: #{tpu_custom_call.1} parent=1 // pred_check_branch
      %41 = sbr.rel (0) target = $region21
    $region20: #{tpu_custom_call.1} parent=1 // pred_region
      %42 = dma.done [#allocation6], 256
    $region21: #{tpu_custom_call.1} parent=1 // pred_fallthru
      _
    %v44 = vld [vmem:[#allocation2] sm:$0xff]
    %v45 = vld [vmem:[#allocation2 + $0x8] sm:$0xff]
    %v46 = vpack.c.bf16 %v45, %v44
    %v47 = vld [vmem:[#allocation5] sm:$0xf]
    %v48 = vld [vmem:[#allocation5 + $0x4] sm:$0xf]
    %v49 = vld [vmem:[#allocation5 + $0x8] sm:$0xf]
    %v50 = vld [vmem:[#allocation5 + $0xc] sm:$0xf]
    %v51 = vld [vmem:[%s2] sm:$0x1]
    %v53 = vlaneseq
    %v54 = vshrl.u32 %v53, 7
    %v55 = vsub.s32 0, %v54
    %v56 = vrot.slane %v51, %v55
    %v62 = vunpack.c.l.b16 %v47
    %v63 = vunpack.c.l.b16 %v48
    %v64 = vunpack.c.l.b16 %v49
    %v65 = vunpack.c.l.b16 %v50
    %v66 = vpack.c.b16 %v63, %v62
    %v67 = vpack.c.b16 %v65, %v64
    %vm70 = vcmask 261120
    %v72 = vsel %vm70, %v46, 0
    %74 = vmatprep.subr.bf16.mxu0 0
    %75 = vmatpush1.bf16.msra.mxu0 0
    %76 = vmatprep.subr.bf16.mxu0 0
    %77 = vmatpush1.bf16.msra.mxu0 0
    %78 = vmatprep.subr.bf16.mxu0 0
    %79 = vmatpush1.bf16.msra.mxu0 0
    %80 = vmatprep.subr.bf16.mxu0 0
    %81 = vmatpush1.bf16.msra.mxu0 0
    %82 = vmatprep.subr.bf16.mxu0 0
    %83 = vmatpush1.bf16.msra.mxu0 0
    %84 = vmatprep.subr.bf16.mxu0 0
    %85 = vmatpush1.bf16.msra.mxu0 0
    %86 = vmatprep.subr.bf16.mxu0 0
    %87 = vmatpush1.bf16.msra.mxu0 %v67
    %88 = vmatprep.subr.bf16.mxu0 0
    %89 = vmatpush1.bf16.msra.mxu0 %v66
    %90 = vmatprep.subr.bf16.mxu0 0
    %91 = vmatpush2.bf16.msra.mxu0 0
    %92 = vmatprep.subr.bf16.mxu0 0
    %93 = vmatpush2.bf16.msra.mxu0 0
    %94 = vmatprep.subr.bf16.mxu0 0
    %95 = vmatpush2.bf16.msra.mxu0 0
    %96 = vmatprep.subr.bf16.mxu0 0
    %97 = vmatpush2.bf16.msra.mxu0 0
    %98 = vmatprep.subr.bf16.mxu0 0
    %99 = vmatpush2.bf16.msra.mxu0 0
    %100 = vmatprep.subr.bf16.mxu0 0
    %101 = vmatpush2.bf16.msra.mxu0 0
    %102 = vmatprep.subr.bf16.mxu0 0
    %103 = vmatpush2.bf16.msra.mxu0 0
    %104 = vmatprep.subr.bf16.mxu0 0
    %105 = vmatpush2.bf16.msra.mxu0 0
    %106 = vmatprep.mubr.bf16.mxu0 0
    %107 = vmatmul.mubr.bf16.gmra.mxu0 %v72
    %v108 = vpop.f32.mrf.mxu0
    %v109 = vadd.f32 %v56, %v108
    %v110 = vpop.f32.mrf.mxu0
    %v111 = vpop.f32.mrf.mxu0
    %v112 = vadd.f32 %v56, %v111
    %v113 = vpop.f32.mrf.mxu0
    %114 = vdwg.mxu0
    %v115 = vtanh.pop %v109
    %v116 = vtanh.pop %v112
    %117 = vst.msk [vmem:[#allocation7] sm:$0xff] %vm70, %v115
    %118 = vst.msk [vmem:[#allocation7 + $0x8] sm:$0xff] %vm70, %v116
    // Predicated region
    $region22: #{tpu_custom_call.1} parent=1 // pred_check
      _
    $region23: #{tpu_custom_call.1} parent=1 // pred_check_branch
      %120 = sbr.rel (0) target = $region25
    $region24: #{tpu_custom_call.1} parent=1 // pred_region
      %s122 = ssub.s32 256, 256
      %123 = vsyncadd [#allocation4], %s122
      %s124 = sshll.u32 [#allocation7], 4
      %s125 = int_to_ptr.vmem [resolvable:$true] %s124
      %130 = dma.vmem_to_hbm [thread:$0]  %s125, 256, %s3, [#allocation4], 128, 128, 8
    $region25: #{tpu_custom_call.1} parent=1 // pred_fallthru
      _
    // Predicated region
    $region26: #{tpu_custom_call.1} parent=1 // pred_check
      _
    $region27: #{tpu_custom_call.1} parent=1 // pred_check_branch
      %132 = sbr.rel (0) target = $region29
    $region28: #{tpu_custom_call.1} parent=1 // pred_region
      %133 = dma.done [#allocation4], 256
    $region29: #{tpu_custom_call.1} parent=1 // pred_fallthru
      _
    %134 = vsyncpa [#allocation3], 1
    %135 = vsyncpa [#allocation6], 1
    %136 = vsyncpa [#allocation4], 1

// kernel: tpu_custom_call.1
$region0: #{tpu_custom_call.1}
  #allocation0 [shape = 'u32[]', space=smem, size = 0x4, offset = 0x4, fixed_abs, tag = 'smem constant byte address 0x4 - core index']
  #allocation1 [shape = 'u32[144,128]{1,0:T(1,128)}', space=vmem, size = 0x12000, scoped, tag = 'internal scratch']
  %s0 = inlined_call_operand.hbm [shape: f32[16,32], index: 0, kind: input, shape index: {}]
  %s1 = inlined_call_operand.hbm [shape: bf16[32,32], index: 1, kind: input, shape index: {}]
  %s2 = inlined_call_operand.vmem [shape: f32[1,32], index: 2, kind: input, shape index: {}]
  %s3 = inlined_call_operand.hbm [shape: f32[16,32], index: 3, kind: output, shape index: {}]
  %s4 = sld [smem:[#allocation0]]
  $region30: #{tpu_custom_call.1} parent=0
    _
  %s6 = ssub.s32 1, %s4
  %s7 = scalar_select 0, %s6, %s4
  $region1: #{tpu_custom_call.1} parent=0
    #allocation2 [shape = 'u8[8192]{0}', space=vmem, size = 0x2000, scoped, tag = 'input window, operand 0, single buffered']
    #allocation3 [shape = 's32[1]{0}', space=sflag, size = 0x4, scoped, tag = 'scoped memory for tpu_custom_call.1']
    #allocation4 [shape = 's32[1]{0}', space=sflag, size = 0x4, scoped, tag = 'scoped memory for tpu_custom_call.1']
    #allocation5 [shape = 'u8[8192]{0}', space=vmem, size = 0x2000, scoped, tag = 'input window, operand 1, single buffered']
    #allocation6 [shape = 's32[1]{0}', space=sflag, size = 0x4, scoped, tag = 'scoped memory for tpu_custom_call.1']
    #allocation7 [shape = 'u8[8192]{0}', space=vmem, size = 0x2000, scoped, tag = 'output window, operand 0, single buffered']
    %8 = vsyncpa [#allocation3], 0
    %9 = vsyncpa [#allocation6], 0
    %10 = vsyncpa [#allocation4], 0
    // Predicated region
    $region2: #{tpu_custom_call.1} parent=1 // pred_check
      _
    $region3: #{tpu_custom_call.1} parent=1 // pred_check_branch
      %12 = sbr.rel (0) target = $region5
    $region4: #{tpu_custom_call.1} parent=1 // pred_region
      %s14 = ssub.s32 256, 256
      %15 = vsyncadd [#allocation3], %s14
      %s16 = sshll.u32 [#allocation2], 4
      %s17 = int_to_ptr.vmem [resolvable:$true] %s16
      %22 = dma.hbm_to_vmem [thread:$0]  %s0, 256, %s17, [#allocation3], 128, 128, 8
    $region5: #{tpu_custom_call.1} parent=1 // pred_fallthru
      _
    // Predicated region
    $region6: #{tpu_custom_call.1} parent=1 // pred_check
      _
    $region7: #{tpu_custom_call.1} parent=1 // pred_check_branch
      %24 = sbr.rel (0) target = $region9
    $region8: #{tpu_custom_call.1} parent=1 // pred_region
      %s26 = ssub.s32 256, 256
      %27 = vsyncadd [#allocation6], %s26
      %s28 = sshll.u32 [#allocation5], 4
      %s29 = int_to_ptr.vmem [resolvable:$true] %s28
      %34 = dma.hbm_to_vmem [thread:$0]  %s1, 256, %s29, [#allocation6], 64, 64, 4
    $region9: #{tpu_custom_call.1} parent=1 // pred_fallthru
      _
    // Predicated region
    $region10: #{tpu_custom_call.1} parent=1 // pred_check
      _
    $region11: #{tpu_custom_call.1} parent=1 // pred_check_branch
      %36 = sbr.rel (0) target = $region13
    $region12: #{tpu_custom_call.1} parent=1 // pred_region
      _
    $region13: #{tpu_custom_call.1} parent=1 // pred_fallthru
      _
    // Predicated region
    $region14: #{tpu_custom_call.1} parent=1 // pred_check
      _
    $region15: #{tpu_custom_call.1} parent=1 // pred_check_branch
      %38 = sbr.rel (0) target = $region17
    $region16: #{tpu_custom_call.1} parent=1 // pred_region
      %39 = dma.done [#allocation3], 256
    $region17: #{tpu_custom_call.1} parent=1 // pred_fallthru
      _
    // Predicated region
    $region18: #{tpu_custom_call.1} parent=1 // pred_check
      _
    $region19: #{tpu_custom_call.1} parent=1 // pred_check_branch
      %41 = sbr.rel (0) target = $region21
    $region20: #{tpu_custom_call.1} parent=1 // pred_region
      %42 = dma.done [#allocation6], 256
    $region21: #{tpu_custom_call.1} parent=1 // pred_fallthru
      _
    %v44 = vld [vmem:[#allocation2] sm:$0xff]
    %v45 = vld [vmem:[#allocation2 + $0x8] sm:$0xff]
    %v46 = vpack.c.bf16 %v45, %v44
    %v47 = vld [vmem:[#allocation5] sm:$0xf]
    %v48 = vld [vmem:[#allocation5 + $0x4] sm:$0xf]
    %v49 = vld [vmem:[#allocation5 + $0x8] sm:$0xf]
    %v50 = vld [vmem:[#allocation5 + $0xc] sm:$0xf]
    %v51 = vld [vmem:[%s2] sm:$0x1]
    %v53 = vlaneseq
    %v54 = vshrl.u32 %v53, 7
    %v55 = vsub.s32 0, %v54
    %v56 = vrot.slane %v51, %v55
    %v62 = vunpack.c.l.b16 %v47
    %v63 = vunpack.c.l.b16 %v48
    %v64 = vunpack.c.l.b16 %v49
    %v65 = vunpack.c.l.b16 %v50
    %v66 = vpack.c.b16 %v63, %v62
    %v67 = vpack.c.b16 %v65, %v64
    %vm70 = vcmask 261120
    %v72 = vsel %vm70, %v46, 0
    %74 = vmatprep.subr.bf16.mxu0 0
    %75 = vmatpush1.bf16.msra.mxu0 0
    %76 = vmatprep.subr.bf16.mxu0 0
    %77 = vmatpush1.bf16.msra.mxu0 0
    %78 = vmatprep.subr.bf16.mxu0 0
    %79 = vmatpush1.bf16.msra.mxu0 0
    %80 = vmatprep.subr.bf16.mxu0 0
    %81 = vmatpush1.bf16.msra.mxu0 0
    %82 = vmatprep.subr.bf16.mxu0 0
    %83 = vmatpush1.bf16.msra.mxu0 0
    %84 = vmatprep.subr.bf16.mxu0 0
    %85 = vmatpush1.bf16.msra.mxu0 0
    %86 = vmatprep.subr.bf16.mxu0 0
    %87 = vmatpush1.bf16.msra.mxu0 %v67
    %88 = vmatprep.subr.bf16.mxu0 0
    %89 = vmatpush1.bf16.msra.mxu0 %v66
    %90 = vmatprep.subr.bf16.mxu0 0
    %91 = vmatpush2.bf16.msra.mxu0 0
    %92 = vmatprep.subr.bf16.mxu0 0
    %93 = vmatpush2.bf16.msra.mxu0 0
    %94 = vmatprep.subr.bf16.mxu0 0
    %95 = vmatpush2.bf16.msra.mxu0 0
    %96 = vmatprep.subr.bf16.mxu0 0
    %97 = vmatpush2.bf16.msra.mxu0 0
    %98 = vmatprep.subr.bf16.mxu0 0
    %99 = vmatpush2.bf16.msra.mxu0 0
    %100 = vmatprep.subr.bf16.mxu0 0
    %101 = vmatpush2.bf16.msra.mxu0 0
    %102 = vmatprep.subr.bf16.mxu0 0
    %103 = vmatpush2.bf16.msra.mxu0 0
    %104 = vmatprep.subr.bf16.mxu0 0
    %105 = vmatpush2.bf16.msra.mxu0 0
    %106 = vmatprep.mubr.bf16.mxu0 0
    %107 = vmatmul.mubr.bf16.gmra.mxu0 %v72
    %v108 = vpop.f32.mrf.mxu0
    %v109 = vadd.f32 %v56, %v108
    %v110 = vpop.f32.mrf.mxu0
    %v111 = vpop.f32.mrf.mxu0
    %v112 = vadd.f32 %v56, %v111
    %v113 = vpop.f32.mrf.mxu0
    %114 = vdwg.mxu0
    %v115 = vtanh.pop %v109
    %v116 = vtanh.pop %v112
    %117 = vst.msk [vmem:[#allocation7] sm:$0xff] %vm70, %v115
    %118 = vst.msk [vmem:[#allocation7 + $0x8] sm:$0xff] %vm70, %v116
    // Predicated region
    $region22: #{tpu_custom_call.1} parent=1 // pred_check
      _
    $region23: #{tpu_custom_call.1} parent=1 // pred_check_branch
      %120 = sbr.rel (0) target = $region25
    $region24: #{tpu_custom_call.1} parent=1 // pred_region
      %s122 = ssub.s32 256, 256
      %123 = vsyncadd [#allocation4], %s122
      %s124 = sshll.u32 [#allocation7], 4
      %s125 = int_to_ptr.vmem [resolvable:$true] %s124
      %130 = dma.vmem_to_hbm [thread:$0]  %s125, 256, %s3, [#allocation4], 128, 128, 8
    $region25: #{tpu_custom_call.1} parent=1 // pred_fallthru
      _
    // Predicated region
    $region26: #{tpu_custom_call.1} parent=1 // pred_check
      _
    $region27: #{tpu_custom_call.1} parent=1 // pred_check_branch
      %132 = sbr.rel (0) target = $region29
    $region28: #{tpu_custom_call.1} parent=1 // pred_region
      %133 = dma.done [#allocation4], 256
    $region29: #{tpu_custom_call.1} parent=1 // pred_fallthru
      _
    %134 = vsyncpa [#allocation3], 1
    %135 = vsyncpa [#allocation6], 1
    %136 = vsyncpa [#allocation4], 1

</llo_original>
